<compile_context>
chip_gen: v5e
topology: v5e:2x2
jax: 0.10.0
libtpu: 0.0.40
codegen_flags: <defaults>
</compile_context>

<pallas_src>
import functools
import math

import jax
import jax.numpy as jnp
from jax.experimental import pallas as pl
from jax.experimental.pallas import tpu as pltpu


def _round_up(v, m):
    return ((v + m - 1) // m) * m


# ---------------------------------------------------------------------------
# Kernel 1: feature transform  Z = X @ W   (small, row-parallel)
# ---------------------------------------------------------------------------
def _feature_transform_kernel(x_ref, w_ref, o_ref):
    o_ref[...] = jnp.dot(
        x_ref[...], w_ref[...], preferred_element_type=jnp.float32
    ).astype(o_ref.dtype)


def feature_transform(x, w, *, tm=256, out_dtype=jnp.bfloat16):
    """Z = x @ w.   x: (N_pad, F) bf16, w: (F, H_pad) bf16, H_pad % 128 == 0."""
    n_pad, f = x.shape
    h_pad = w.shape[1]
    assert w.shape[0] == f and n_pad % tm == 0 and h_pad % 128 == 0

    return pl.pallas_call(
        _feature_transform_kernel,
        out_shape=jax.ShapeDtypeStruct((n_pad, h_pad), out_dtype),
        grid_spec=pltpu.PrefetchScalarGridSpec(
            num_scalar_prefetch=0,
            grid=(n_pad // tm,),
            in_specs=[
                pl.BlockSpec((tm, f), lambda i: (i, 0)),    # X row tile
                pl.BlockSpec((f, h_pad), lambda i: (0, 0)),  # W resident
            ],
            out_specs=pl.BlockSpec((tm, h_pad), lambda i: (i, 0)),
        ),
        compiler_params=pltpu.CompilerParams(
            dimension_semantics=("parallel",),
        ),
        cost_estimate=pl.CostEstimate(
            flops=2 * n_pad * f * h_pad,
            transcendentals=0,
            bytes_accessed=n_pad * f * 2 + f * h_pad * 2 + n_pad * h_pad * 2,
        ),
    )(x, w)


# ---------------------------------------------------------------------------
# Kernel 2: aggregation  out = act(A_hat @ Z + b), K-tiled f32 accumulation
# ---------------------------------------------------------------------------
def _aggregate_kernel(a_ref, z_ref, b_ref, o_ref, acc_ref, *, apply_relu):
    k = pl.program_id(1)

    @pl.when(k == 0)
    def _():
        acc_ref[...] = jnp.zeros_like(acc_ref)

    acc_ref[...] += jnp.dot(
        a_ref[...], z_ref[...], preferred_element_type=jnp.float32
    )

    @pl.when(k == pl.num_programs(1) - 1)
    def _():
        acc = acc_ref[...] + b_ref[...]          # f32 bias add (broadcast rows)
        if apply_relu:
            acc = jnp.maximum(acc, 0.0)
        o_ref[...] = acc.astype(o_ref.dtype)


def aggregate(a_hat, z, b, *, apply_relu, out_dtype, tm=256, tk=512):
    """act(A_hat @ z + b).

    a_hat : (N_pad, N_pad) bf16, N_pad multiple of tm and tk
    z     : (N_pad, H_pad) bf16, H_pad multiple of 128
    b     : (1, H_pad)     f32
    """
    n_pad, n_pad2 = a_hat.shape
    h_pad = z.shape[1]
    assert n_pad == n_pad2 and z.shape[0] == n_pad
    assert n_pad % tm == 0 and n_pad % tk == 0 and h_pad % 128 == 0

    kernel = functools.partial(_aggregate_kernel, apply_relu=apply_relu)
    out_bytes = jnp.dtype(out_dtype).itemsize

    # Tile budget: double-buffered A + Z + out, f32 accumulator, bias.
    tile_bytes = (
        2 * tm * tk * 2
        + 2 * tk * h_pad * 2
        + 2 * tm * h_pad * out_bytes
        + tm * h_pad * 4
        + 2 * h_pad * 4
    )
    vmem_limit = int(min(64 << 20, max(32 << 20, tile_bytes + (4 << 20))))

    return pl.pallas_call(
        kernel,
        out_shape=jax.ShapeDtypeStruct((n_pad, h_pad), out_dtype),
        grid_spec=pltpu.PrefetchScalarGridSpec(
            num_scalar_prefetch=0,
            grid=(n_pad // tm, n_pad // tk),
            in_specs=[
                pl.BlockSpec((tm, tk), lambda i, k: (i, k)),     # A_hat tile
                pl.BlockSpec((tk, h_pad), lambda i, k: (k, 0)),  # Z row-block
                pl.BlockSpec((1, h_pad), lambda i, k: (0, 0)),   # bias row
            ],
            out_specs=pl.BlockSpec((tm, h_pad), lambda i, k: (i, 0)),
            scratch_shapes=[pltpu.VMEM((tm, h_pad), jnp.float32)],  # f32 acc
        ),
        compiler_params=pltpu.CompilerParams(
            # Row tiles are independent (Z hoisted) -> parallel across cores;
            # K axis is the reduction -> arbitrary, last.
            dimension_semantics=("parallel", "arbitrary"),
            vmem_limit_bytes=vmem_limit,
        ),
        cost_estimate=pl.CostEstimate(
            flops=2 * n_pad * n_pad * h_pad,
            transcendentals=0,
            bytes_accessed=(
                n_pad * n_pad * 2                       # A_hat stream
                + (n_pad // tm) * n_pad * h_pad * 2     # Z re-streamed per row tile
                + n_pad * h_pad * out_bytes             # output
            ),
        ),
    )(a_hat, z, b)


# ---------------------------------------------------------------------------
# Dense symmetric GCN normalization (PyG-style), built directly at the
# padded shape (pad rows/cols are zero; self-loops only for real nodes).
# ---------------------------------------------------------------------------
def normalized_adjacency_padded(edge_index, num_nodes, n_pad, dtype=jnp.bfloat16):
    src, dst = edge_index[0], edge_index[1]
    a = jnp.zeros((n_pad, n_pad), jnp.float32)
    # message flows src -> dst, so aggregation matrix is A_hat[dst, src];
    # duplicate edges accumulate (matches PyG's scatter-add of edge weights).
    a = a.at[dst, src].add(1.0)
    diag = jnp.diagonal(a)
    real = jnp.arange(n_pad) < num_nodes
    a = a + jnp.diag(jnp.where((diag == 0.0) & real, 1.0, 0.0))
    deg = jnp.sum(a, axis=1)
    d_inv_sqrt = jnp.where(deg > 0.0, jax.lax.rsqrt(deg), 0.0)
    return (d_inv_sqrt[:, None] * a * d_inv_sqrt[None, :]).astype(dtype)


def normalized_adjacency(edge_index, num_nodes):
    """Unpadded f32 version (used only by the reference checks)."""
    return normalized_adjacency_padded(
        edge_index, num_nodes, num_nodes, dtype=jnp.float32
    )


# ---------------------------------------------------------------------------
# Parameters (Glorot-uniform weights, zero biases, like GCNConv)
# ---------------------------------------------------------------------------
def init_gcn_params(key, num_features, hidden_channels, num_classes):
    k1, k2 = jax.random.split(key)

    def glorot(k, fan_in, fan_out):
        s = jnp.sqrt(6.0 / (fan_in + fan_out))
        return jax.random.uniform(k, (fan_in, fan_out), jnp.float32, -s, s)

    return {
        "w1": glorot(k1, num_features, hidden_channels),
        "b1": jnp.zeros((hidden_channels,), jnp.float32),
        "w2": glorot(k2, hidden_channels, num_classes),
        "b2": jnp.zeros((num_classes,), jnp.float32),
    }


# ---------------------------------------------------------------------------
# GCN forward (eval mode)
# ---------------------------------------------------------------------------
def gcn_forward(x, edge_index, params, *, tm=256, tk=512):
    n, f = x.shape
    h = params["w1"].shape[1]
    c = params["w2"].shape[1]

    n_pad = _round_up(n, math.lcm(tm, tk))
    h_pad = _round_up(h, 128)
    c_pad = _round_up(c, 128)

    bf = jnp.bfloat16
    a_p = normalized_adjacency_padded(edge_index, n, n_pad, dtype=bf)
    x_p = jnp.zeros((n_pad, f), bf).at[:n, :].set(x.astype(bf))
    w1_p = jnp.zeros((f, h_pad), bf).at[:, :h].set(params["w1"].astype(bf))
    b1_p = jnp.zeros((1, h_pad), jnp.float32).at[0, :h].set(params["b1"])
    w2_p = jnp.zeros((h_pad, c_pad), bf).at[:h, :c].set(params["w2"].astype(bf))
    b2_p = jnp.zeros((1, c_pad), jnp.float32).at[0, :c].set(params["b2"])

    # ----- conv1: Z1 = X @ W1, then relu(A_hat @ Z1 + b1) -----
    z1 = feature_transform(x_p, w1_p, tm=tm, out_dtype=bf)
    h1 = aggregate(a_p, z1, b1_p, apply_relu=True, out_dtype=bf, tm=tm, tk=tk)

    # ----- dropout(p=0.5): identity in eval mode -----

    # ----- conv2: Z2 = H1 @ W2, then A_hat @ Z2 + b2 -----
    z2 = feature_transform(h1, w2_p, tm=tm, out_dtype=bf)
    out_p = aggregate(a_p, z2, b2_p, apply_relu=False, out_dtype=jnp.float32,
                      tm=tm, tk=tk)
    return out_p[:n, :c]


# ---------------------------------------------------------------------------
# References for checking
# ---------------------------------------------------------------------------
def _ref_forward_bf16(x, a_hat, params):
    """Plain-JAX reference mimicking the kernel's bf16-operand / f32-acc flow."""
    bf = jnp.bfloat16
    a_bf = a_hat.astype(bf)
    z1 = jnp.dot(x.astype(bf), params["w1"].astype(bf),
                 preferred_element_type=jnp.float32).astype(bf)
    h1 = jnp.dot(a_bf, z1, preferred_element_type=jnp.float32) + params["b1"]
    h1 = jnp.maximum(h1, 0.0).astype(bf)
    z2 = jnp.dot(h1, params["w2"].astype(bf),
                 preferred_element_type=jnp.float32).astype(bf)
    return jnp.dot(a_bf, z2, preferred_element_type=jnp.float32) + params["b2"]


def _ref_forward_f32(x, a_hat, params):
    h1 = jnp.maximum(a_hat @ (x @ params["w1"]) + params["b1"], 0.0)
    return a_hat @ (h1 @ params["w2"]) + params["b2"]


# ---------------------------------------------------------------------------
# Demo
# ---------------------------------------------------------------------------
if __name__ == "__main__":
    NUM_NODES = 300       # deliberately NOT a multiple of any tile size
    NUM_EDGES = 1024
    NUM_FEATURES = 64     # dataset.num_features stand-in
    HIDDEN = 32           # hidden_channels
    NUM_CLASSES = 8       # dataset.num_classes stand-in

    key = jax.random.PRNGKey(0)
    kx, ks, kd, kp = jax.random.split(key, 4)

    x = jax.random.normal(kx, (NUM_NODES, NUM_FEATURES), jnp.float32)
    src = jax.random.randint(ks, (NUM_EDGES,), 0, NUM_NODES)
    dst = jax.random.randint(kd, (NUM_EDGES,), 0, NUM_NODES)
    edge_index = jnp.stack([src, dst], axis=0)                  # (2, E) int32

    params = init_gcn_params(kp, NUM_FEATURES, HIDDEN, NUM_CLASSES)

    out = gcn_forward(x, edge_index, params, tm=256, tk=512)
    out = jax.block_until_ready(out)
    assert out.shape == (NUM_NODES, NUM_CLASSES)
    assert bool(jnp.all(jnp.isfinite(out)))

    a_hat = normalized_adjacency(edge_index, NUM_NODES)  # f32, for references

    # tight check vs a reference using the same bf16-operand / f32-acc recipe
    ref_bf = _ref_forward_bf16(x, a_hat, params)
    assert jnp.allclose(out, ref_bf, atol=1e-2, rtol=1e-2), (
        float(jnp.max(jnp.abs(out - ref_bf))))

    # loose check vs the pure-f32 math (bf16 operand rounding only)
    ref_f32 = _ref_forward_f32(x, a_hat, params)
    assert jnp.allclose(out, ref_f32, atol=1e-1, rtol=1e-1), (
        float(jnp.max(jnp.abs(out - ref_f32))))

    print("KERNEL_OK")
</pallas_src>

<mosaic_0001>
module attributes {stable_mosaic.version = 11 : i64} {
  func.func @_feature_transform_kernel(%arg0: i32, %arg1: memref<256x64xbf16, #tpu.memory_space<vmem>>, %arg2: memref<64x128xbf16, #tpu.memory_space<vmem>>, %arg3: memref<256x128xbf16, #tpu.memory_space<vmem>>) attributes {dimension_semantics = [#tpu.dimension_semantics<parallel>], iteration_bounds = array<i64: 2>, scalar_prefetch = 0 : i64, scratch_operands = 0 : i64, tpu.core_type = #tpu.core_type<tc>, window_params = [{transform_indices = @transform_0, window_bounds = array<i64: 256, 64>}, {pipeline_mode = #tpu.pipeline_mode<synchronous>, transform_indices = @transform_1, window_bounds = array<i64: 64, 128>}, {transform_indices = @transform_2, window_bounds = array<i64: 256, 128>}]} {
    %c0 = arith.constant 0 : index
    %c0_0 = arith.constant 0 : index
    %0 = vector.load %arg1[%c0, %c0_0] : memref<256x64xbf16, #tpu.memory_space<vmem>>, vector<256x64xbf16>
    %c0_1 = arith.constant 0 : index
    %c0_2 = arith.constant 0 : index
    %1 = vector.load %arg2[%c0_1, %c0_2] : memref<64x128xbf16, #tpu.memory_space<vmem>>, vector<64x128xbf16>
    %cst = arith.constant dense<0.000000e+00> : vector<256x128xf32>
    %2 = tpu.matmul %0, %1, %cst {dimension_numbers = #tpu.dot_dimension_numbers<[1], [0], [0], [1], [0, 0, 1, 1], [], []>} : vector<256x64xbf16>, vector<64x128xbf16>, vector<256x128xf32> -> vector<256x128xf32>
    %3 = arith.truncf %2 : vector<256x128xf32> to vector<256x128xbf16>
    %c0_3 = arith.constant 0 : index
    %c0_4 = arith.constant 0 : index
    %4 = vector.load %arg3[%c0_3, %c0_4] : memref<256x128xbf16, #tpu.memory_space<vmem>>, vector<256x128xbf16>
    tpu.vector_store %arg3[%c0_3, %c0_4], %3 {strides = array<i32>} : memref<256x128xbf16, #tpu.memory_space<vmem>>, vector<256x128xbf16>,
    return
  }
  func.func @transform_0(%arg0: i32) -> (i32, i32) {
    %c0_i32 = arith.constant 0 : i32
    %c0_i32_0 = arith.constant 0 : i32
    return %arg0, %c0_i32 : i32, i32
  }
  func.func @transform_1(%arg0: i32) -> (i32, i32) {
    %c0_i32 = arith.constant 0 : i32
    %c0_i32_0 = arith.constant 0 : i32
    %c0_i32_1 = arith.constant 0 : i32
    return %c0_i32, %c0_i32_0 : i32, i32
  }
  func.func @transform_2(%arg0: i32) -> (i32, i32) {
    %c0_i32 = arith.constant 0 : i32
    %c0_i32_0 = arith.constant 0 : i32
    return %arg0, %c0_i32 : i32, i32
  }
}

</mosaic_0001>

<llo_original>
// kernel: tpu_custom_call.1
$region0: #{tpu_custom_call.1}
  #allocation0 [shape = 'u32[]', space=smem, size = 0x4, offset = 0x4, fixed_abs, tag = 'smem constant byte address 0x4 - core index']
  #allocation1 [shape = 'u32[72,128]{1,0:T(1,128)}', space=vmem, size = 0x9000, scoped, tag = 'internal scratch']
  %s0 = inlined_call_operand.vmem [shape: bf16[512,64], index: 0, kind: input, shape index: {}]
  %s1 = inlined_call_operand.vmem [shape: bf16[64,128], index: 1, kind: input, shape index: {}]
  %s2 = inlined_call_operand.hbm [shape: bf16[512,128], index: 2, kind: output, shape index: {}]
  %s3 = sld [smem:[#allocation0]]
  $region41: #{tpu_custom_call.1} parent=0
    _
  %s5 = ssub.s32 1, %s3
  %s6 = scalar_select 0, %s5, %s3
  $region1: #{tpu_custom_call.1} parent=0
    #allocation2 [shape = 'u8[131072]{0}', space=vmem, size = 0x20000, scoped, tag = 'output window, operand 0']
    #allocation3 [shape = 's32[2]{0}', space=sflag, size = 0x8, scoped, tag = 'scoped memory for tpu_custom_call.1']
    %7 = vsyncpa [#allocation3], 0
    %s8 = scalar_lea.sflag [#allocation3], 1
    %9 = vsyncpa %s8, 0
    loop: start=0, step=1, limit=4
    $region2: #{tpu_custom_call.1} parent=1 // loop_pre_header
      _
    $region3: #{tpu_custom_call.1} parent=1 // loop_header
      %s11 = sphi 0, %s15
      %p12 = scmp.ge.s32.totalorder %s11, 4
      %s21 = sphi 0, %s23
      %s24 = sphi 0, %s21
      %s25 = sphi 0, %s24
      %s41 = sphi 0, %s25
      %s45 = sphi 0, %s45
      %s47 = sphi 0, %s45
      %s48 = sphi 0, %s47
      %s62 = sphi 0, %s48
      %s68 = sphi 0, %s70
      %s71 = sphi 0, %s68
      %s72 = sphi 0, %s71
      %s88 = sphi 0, %s72
    $region4: #{tpu_custom_call.1} parent=1 // loop_header_branch
      %14 = sbr.rel (%p12) target = $region8
    $region5: #{tpu_custom_call.1} parent=1 // loop_body
      %s16 = ssub.s32 %s11, 1
      %s17 = ssub.s32 %s11, 2
      %s18 = sadd.s32 %s11, 1
      %s19 = ssub.s32 %s11, %s18
      %p20 = scmp.eq.s32.totalorder %s19, 0
      %s22 = sadd.s32 %s21, 1
      %s23 = scalar_select %p20, %s21, %s22
      %p26 = pneg %p20
      %p27 = scmp.eq.s32.totalorder %s11, 1
      %p28 = por %p26, %p27
      %p29 = scmp.ne.s32.totalorder %s21, %s24
      %p30 = scmp.eq.s32.totalorder %s11, 0
      %p31 = por %p29, %p30
      %p32 = scmp.ne.s32.totalorder %s21, %s24
      %p33 = scmp.eq.s32.totalorder %s16, 1
      %p34 = por %p32, %p33
      %p35 = scmp.ne.s32.totalorder %s24, %s25
      %p36 = scmp.eq.s32.totalorder %s16, 0
      %p37 = por %p35, %p36
      %p38 = scmp.ne.s32.totalorder %s24, %s25
      %p39 = scmp.eq.s32.totalorder %s17, 1
      %p40 = por %p38, %p39
      %p42 = scmp.ne.s32.totalorder %s25, %s41
      %p43 = scmp.eq.s32.totalorder %s17, 0
      %p44 = por %p42, %p43
      %s46 = sadd.s32 %s45, 1
      %p49 = scmp.eq.s32.totalorder %s11, 1
      %p50 = scmp.ne.s32.totalorder %s45, %s47
      %p51 = scmp.eq.s32.totalorder %s11, 0
      %p52 = por %p50, %p51
      %p53 = scmp.ne.s32.totalorder %s45, %s47
      %p54 = scmp.eq.s32.totalorder %s16, 1
      %p55 = por %p53, %p54
      %p56 = scmp.ne.s32.totalorder %s47, %s48
      %p57 = scmp.eq.s32.totalorder %s16, 0
      %p58 = por %p56, %p57
      %p59 = scmp.ne.s32.totalorder %s47, %s48
      %p60 = scmp.eq.s32.totalorder %s17, 1
      %p61 = por %p59, %p60
      %p63 = scmp.ne.s32.totalorder %s48, %s62
      %p64 = scmp.eq.s32.totalorder %s17, 0
      %p65 = por %p63, %p64
      %s66 = ssub.s32 %s11, %s18
      %p67 = scmp.eq.s32.totalorder %s66, 0
      %s69 = sadd.s32 %s68, 1
      %s70 = scalar_select %p67, %s68, %s69
      %p73 = pneg %p67
      %p74 = scmp.eq.s32.totalorder %s11, 1
      %p75 = por %p73, %p74
      %p76 = scmp.ne.s32.totalorder %s68, %s71
      %p77 = scmp.eq.s32.totalorder %s11, 0
      %p78 = por %p76, %p77
      %p79 = scmp.ne.s32.totalorder %s68, %s71
      %p80 = scmp.eq.s32.totalorder %s16, 1
      %p81 = por %p79, %p80
      %p82 = scmp.ne.s32.totalorder %s71, %s72
      %p83 = scmp.eq.s32.totalorder %s16, 0
      %p84 = por %p82, %p83
      %p85 = scmp.ne.s32.totalorder %s71, %s72
      %p86 = scmp.eq.s32.totalorder %s17, 1
      %p87 = por %p85, %p86
      %p89 = scmp.ne.s32.totalorder %s72, %s88
      %p90 = scmp.eq.s32.totalorder %s17, 0
      %p91 = por %p89, %p90
      %p92 = scmp.le.s32.totalorder 1, %s11
      %p93 = scmp.lt.s32.totalorder %s11, 3
      %p94 = pnand %p92, %p93
      %p95 = pneg %p94
      // Predicated region
      $region9: #{tpu_custom_call.1} parent=5 // pred_check
        _
      $region10: #{tpu_custom_call.1} parent=5 // pred_check_branch
        %97 = sbr.rel (%p94) target = $region12
      $region11: #{tpu_custom_call.1} parent=5 // pred_region
        %s98 = ssub.s32 %s11, 1
        // Predicated region
        $region13: #{tpu_custom_call.1} parent=11 // pred_check
          %p99 = pneg %p58
        $region14: #{tpu_custom_call.1} parent=11 // pred_check_branch
          %101 = sbr.rel (%p99) target = $region16
        $region15: #{tpu_custom_call.1} parent=11 // pred_region
          _
        $region16: #{tpu_custom_call.1} parent=11 // pred_fallthru
          _
      $region12: #{tpu_custom_call.1} parent=5 // pred_fallthru
        _
      %p102 = scmp.lt.s32.totalorder %s11, 2
      // Predicated region
      $region17: #{tpu_custom_call.1} parent=5 // pred_check
        %p103 = pneg %p102
      $region18: #{tpu_custom_call.1} parent=5 // pred_check_branch
        %105 = sbr.rel (%p103) target = $region20
      $region19: #{tpu_custom_call.1} parent=5 // pred_region
        // Predicated region
        $region21: #{tpu_custom_call.1} parent=19 // pred_check
          %p106 = pneg %p31
        $region22: #{tpu_custom_call.1} parent=19 // pred_check_branch
          %108 = sbr.rel (%p106) target = $region24
        $region23: #{tpu_custom_call.1} parent=19 // pred_region
          %s109 = smul.u32 32, %s11
          %p110 = scmp.lt.s32.totalorder %s109, 63
          %s111 = scalar_select %p110, %s109, 63
          %s112 = smul.addr %s111, 4
          %s113 = scalar_lea.vmem %s0, %s112
          %s114 = smul.u32 32, %s11
        $region24: #{tpu_custom_call.1} parent=19 // pred_fallthru
          _
      $region20: #{tpu_custom_call.1} parent=5 // pred_fallthru
        _
      %p115 = scmp.le.s32.totalorder 1, %s11
      %p116 = scmp.lt.s32.totalorder %s11, 3
      %p117 = pnand %p115, %p116
      %p118 = pneg %p117
      // Predicated region
      $region25: #{tpu_custom_call.1} parent=5 // pred_check
        _
      $region26: #{tpu_custom_call.1} parent=5 // pred_check_branch
        %120 = sbr.rel (%p117) target = $region28
      $region27: #{tpu_custom_call.1} parent=5 // pred_region
        %s121 = ssub.s32 %s11, 1
        %s122 = smul.u32 32, %s16
        %p123 = scmp.lt.s32.totalorder %s122, 63
        %s124 = scalar_select %p123, %s122, 63
        %s125 = smul.addr %s124, 4
        %s126 = scalar_lea.vmem %s0, %s125
        %p127 = pneg %p37
        %p128 = pneg %p34
        %p129 = pneg %p58
        %p130 = pneg %p55
        %p131 = pneg %p84
        %p132 = pneg %p81
        %s133 = sand.u32 %s71, 1
        %s134 = scalar_lea.sflag [#allocation3], %s133
        %s135 = sand.u32 %s71, 1
        %s136 = smul.addr %s135, 128
        %s137 = scalar_lea.vmem [#allocation2], %s136
        %s138 = smul.u32 32, %s16
        %p139 = scmp.lt.s32.totalorder %s138, 63
        %s140 = scalar_select %p139, %s138, 63
        %s141 = smul.addr %s140, 4
        %s142 = scalar_lea.vmem %s0, %s141
        %s143 = smul.u32 32, %s16
        %s144 = smul.u32 32, %s16
        %v146 = vld [vmem:[%s142] sm:$0xf]
        %v147 = vld [vmem:[%s142 + $0x4] sm:$0xf]
        %v148 = vld [vmem:[%s142 + $0x8] sm:$0xf]
        %v149 = vld [vmem:[%s142 + $0xc] sm:$0xf]
        %v150 = vld [vmem:[%s142 + $0x10] sm:$0xf]
        %v151 = vld [vmem:[%s142 + $0x14] sm:$0xf]
        %v152 = vld [vmem:[%s142 + $0x18] sm:$0xf]
        %v153 = vld [vmem:[%s142 + $0x1c] sm:$0xf]
        %v154 = vld [vmem:[%s142 + $0x20] sm:$0xf]
        %v155 = vld [vmem:[%s142 + $0x24] sm:$0xf]
        %v156 = vld [vmem:[%s142 + $0x28] sm:$0xf]
        %v157 = vld [vmem:[%s142 + $0x2c] sm:$0xf]
        %v158 = vld [vmem:[%s142 + $0x30] sm:$0xf]
        %v159 = vld [vmem:[%s142 + $0x34] sm:$0xf]
        %v160 = vld [vmem:[%s142 + $0x38] sm:$0xf]
        %v161 = vld [vmem:[%s142 + $0x3c] sm:$0xf]
        %v162 = vld [vmem:[%s142 + $0x40] sm:$0xf]
        %v163 = vld [vmem:[%s142 + $0x44] sm:$0xf]
        %v164 = vld [vmem:[%s142 + $0x48] sm:$0xf]
        %v165 = vld [vmem:[%s142 + $0x4c] sm:$0xf]
        %v166 = vld [vmem:[%s142 + $0x50] sm:$0xf]
        %v167 = vld [vmem:[%s142 + $0x54] sm:$0xf]
        %v168 = vld [vmem:[%s142 + $0x58] sm:$0xf]
        %v169 = vld [vmem:[%s142 + $0x5c] sm:$0xf]
        %v170 = vld [vmem:[%s142 + $0x60] sm:$0xf]
        %v171 = vld [vmem:[%s142 + $0x64] sm:$0xf]
        %v172 = vld [vmem:[%s142 + $0x68] sm:$0xf]
        %v173 = vld [vmem:[%s142 + $0x6c] sm:$0xf]
        %v174 = vld [vmem:[%s142 + $0x70] sm:$0xf]
        %v175 = vld [vmem:[%s142 + $0x74] sm:$0xf]
        %v176 = vld [vmem:[%s142 + $0x78] sm:$0xf]
        %v177 = vld [vmem:[%s142 + $0x7c] sm:$0xf]
        %v178 = vld [vmem:[%s1] sm:$0xf]
        %v179 = vld [vmem:[%s1 + $0x4] sm:$0xf]
        %v180 = vld [vmem:[%s1 + $0x8] sm:$0xf]
        %v181 = vld [vmem:[%s1 + $0xc] sm:$0xf]
        %v182 = vld [vmem:[%s1 + $0x10] sm:$0xf]
        %v183 = vld [vmem:[%s1 + $0x14] sm:$0xf]
        %v184 = vld [vmem:[%s1 + $0x18] sm:$0xf]
        %v185 = vld [vmem:[%s1 + $0x1c] sm:$0xf]
        %v218 = vunpack.c.l.b16 %v146
        %v219 = vunpack.c.l.b16 %v147
        %v220 = vunpack.c.l.b16 %v148
        %v221 = vunpack.c.l.b16 %v149
        %v222 = vunpack.c.l.b16 %v150
        %v223 = vunpack.c.l.b16 %v151
        %v224 = vunpack.c.l.b16 %v152
        %v225 = vunpack.c.l.b16 %v153
        %v226 = vunpack.c.l.b16 %v154
        %v227 = vunpack.c.l.b16 %v155
        %v228 = vunpack.c.l.b16 %v156
        %v229 = vunpack.c.l.b16 %v157
        %v230 = vunpack.c.l.b16 %v158
        %v231 = vunpack.c.l.b16 %v159
        %v232 = vunpack.c.l.b16 %v160
        %v233 = vunpack.c.l.b16 %v161
        %v234 = vunpack.c.l.b16 %v162
        %v235 = vunpack.c.l.b16 %v163
        %v236 = vunpack.c.l.b16 %v164
        %v237 = vunpack.c.l.b16 %v165
        %v238 = vunpack.c.l.b16 %v166
        %v239 = vunpack.c.l.b16 %v167
        %v240 = vunpack.c.l.b16 %v168
        %v241 = vunpack.c.l.b16 %v169
        %v242 = vunpack.c.l.b16 %v170
        %v243 = vunpack.c.l.b16 %v171
        %v244 = vunpack.c.l.b16 %v172
        %v245 = vunpack.c.l.b16 %v173
        %v246 = vunpack.c.l.b16 %v174
        %v247 = vunpack.c.l.b16 %v175
        %v248 = vunpack.c.l.b16 %v176
        %v249 = vunpack.c.l.b16 %v177
        %v250 = vpack.c.b16 %v219, %v218
        %v251 = vpack.c.b16 %v221, %v220
        %v252 = vpack.c.b16 %v223, %v222
        %v253 = vpack.c.b16 %v225, %v224
        %v254 = vpack.c.b16 %v227, %v226
        %v255 = vpack.c.b16 %v229, %v228
        %v256 = vpack.c.b16 %v231, %v230
        %v257 = vpack.c.b16 %v233, %v232
        %v258 = vpack.c.b16 %v235, %v234
        %v259 = vpack.c.b16 %v237, %v236
        %v260 = vpack.c.b16 %v239, %v238
        %v261 = vpack.c.b16 %v241, %v240
        %v262 = vpack.c.b16 %v243, %v242
        %v263 = vpack.c.b16 %v245, %v244
        %v264 = vpack.c.b16 %v247, %v246
        %v265 = vpack.c.b16 %v249, %v248
        %v274 = vunpack.c.l.b16 %v178
        %v275 = vunpack.c.l.b16 %v179
        %v276 = vunpack.c.l.b16 %v180
        %v277 = vunpack.c.l.b16 %v181
        %v278 = vunpack.c.l.b16 %v182
        %v279 = vunpack.c.l.b16 %v183
        %v280 = vunpack.c.l.b16 %v184
        %v281 = vunpack.c.l.b16 %v185
        %v282 = vpack.c.b16 %v275, %v274
        %v283 = vpack.c.b16 %v277, %v276
        %v284 = vpack.c.b16 %v279, %v278
        %v285 = vpack.c.b16 %v281, %v280
        %vm290 = vcmask 523264
        %v292 = vsel %vm290, %v250, 0
        %v295 = vsel %vm290, %v251, 0
        %v298 = vsel %vm290, %v252, 0
        %v301 = vsel %vm290, %v253, 0
        %v304 = vsel %vm290, %v254, 0
        %v307 = vsel %vm290, %v255, 0
        %v310 = vsel %vm290, %v256, 0
        %v313 = vsel %vm290, %v257, 0
        %v316 = vsel %vm290, %v258, 0
        %v319 = vsel %vm290, %v259, 0
        %v322 = vsel %vm290, %v260, 0
        %v325 = vsel %vm290, %v261, 0
        %v328 = vsel %vm290, %v262, 0
        %v331 = vsel %vm290, %v263, 0
        %v334 = vsel %vm290, %v264, 0
        %v337 = vsel %vm290, %v265, 0
        %339 = vmatpush.bf16.msra.mxu0 0
        %340 = vmatpush.bf16.msra.mxu0 0
        %341 = vmatpush.bf16.msra.mxu0 0
        %342 = vmatpush.bf16.msra.mxu0 0
        %343 = vmatpush.bf16.msra.mxu0 %v285
        %344 = vmatpush.bf16.msra.mxu0 %v284
        %345 = vmatpush.bf16.msra.mxu0 %v283
        %346 = vmatpush.bf16.msra.mxu0 %v282
        %347 = vmatmul.bf16.gmra.mxu0 %v292
        %v348 = vpop.f32.mrf.mxu0
        %v349 = vadd.f32 0.0, %v348
        %v350 = vpop.f32.mrf.mxu0
        %v351 = vadd.f32 0.0, %v350
        %352 = vmatmul.bf16.gmra.mxu0 %v295
        %v353 = vpop.f32.mrf.mxu0
        %v354 = vadd.f32 0.0, %v353
        %v355 = vpop.f32.mrf.mxu0
        %v356 = vadd.f32 0.0, %v355
        %357 = vmatmul.bf16.gmra.mxu0 %v298
        %v358 = vpop.f32.mrf.mxu0
        %v359 = vadd.f32 0.0, %v358
        %v360 = vpop.f32.mrf.mxu0
        %v361 = vadd.f32 0.0, %v360
        %362 = vmatmul.bf16.gmra.mxu0 %v301
        %v363 = vpop.f32.mrf.mxu0
        %v364 = vadd.f32 0.0, %v363
        %v365 = vpop.f32.mrf.mxu0
        %v366 = vadd.f32 0.0, %v365
        %367 = vmatmul.bf16.gmra.mxu0 %v304
        %v368 = vpop.f32.mrf.mxu0
        %v369 = vadd.f32 0.0, %v368
        %v370 = vpop.f32.mrf.mxu0
        %v371 = vadd.f32 0.0, %v370
        %372 = vmatmul.bf16.gmra.mxu0 %v307
        %v373 = vpop.f32.mrf.mxu0
        %v374 = vadd.f32 0.0, %v373
        %v375 = vpop.f32.mrf.mxu0
        %v376 = vadd.f32 0.0, %v375
        %377 = vmatmul.bf16.gmra.mxu0 %v310
        %v378 = vpop.f32.mrf.mxu0
        %v379 = vadd.f32 0.0, %v378
        %v380 = vpop.f32.mrf.mxu0
        %v381 = vadd.f32 0.0, %v380
        %382 = vmatmul.bf16.gmra.mxu0 %v313
        %v383 = vpop.f32.mrf.mxu0
        %v384 = vadd.f32 0.0, %v383
        %v385 = vpop.f32.mrf.mxu0
        %v386 = vadd.f32 0.0, %v385
        %387 = vmatmul.bf16.gmra.mxu0 %v316
        %v388 = vpop.f32.mrf.mxu0
        %v389 = vadd.f32 0.0, %v388
        %v390 = vpop.f32.mrf.mxu0
        %v391 = vadd.f32 0.0, %v390
        %392 = vmatmul.bf16.gmra.mxu0 %v319
        %v393 = vpop.f32.mrf.mxu0
        %v394 = vadd.f32 0.0, %v393
        %v395 = vpop.f32.mrf.mxu0
        %v396 = vadd.f32 0.0, %v395
        %397 = vmatmul.bf16.gmra.mxu0 %v322
        %v398 = vpop.f32.mrf.mxu0
        %v399 = vadd.f32 0.0, %v398
        %v400 = vpop.f32.mrf.mxu0
        %v401 = vadd.f32 0.0, %v400
        %402 = vmatmul.bf16.gmra.mxu0 %v325
        %v403 = vpop.f32.mrf.mxu0
        %v404 = vadd.f32 0.0, %v403
        %v405 = vpop.f32.mrf.mxu0
        %v406 = vadd.f32 0.0, %v405
        %407 = vmatmul.bf16.gmra.mxu0 %v328
        %v408 = vpop.f32.mrf.mxu0
        %v409 = vadd.f32 0.0, %v408
        %v410 = vpop.f32.mrf.mxu0
        %v411 = vadd.f32 0.0, %v410
        %412 = vmatmul.bf16.gmra.mxu0 %v331
        %v413 = vpop.f32.mrf.mxu0
        %v414 = vadd.f32 0.0, %v413
        %v415 = vpop.f32.mrf.mxu0
        %v416 = vadd.f32 0.0, %v415
        %417 = vmatmul.bf16.gmra.mxu0 %v334
        %v418 = vpop.f32.mrf.mxu0
        %v419 = vadd.f32 0.0, %v418
        %v420 = vpop.f32.mrf.mxu0
        %v421 = vadd.f32 0.0, %v420
        %422 = vmatmul.bf16.gmra.mxu0 %v337
        %v423 = vpop.f32.mrf.mxu0
        %v424 = vadd.f32 0.0, %v423
        %v425 = vpop.f32.mrf.mxu0
        %v426 = vadd.f32 0.0, %v425
        %427 = vdwg.mxu0
        %v428 = vpack.c.bf16 %v349, %v349
        %v429 = vpack.c.bf16 %v351, %v351
        %v430 = vpack.c.bf16 %v354, %v354
        %v431 = vpack.c.bf16 %v356, %v356
        %v432 = vpack.c.bf16 %v359, %v359
        %v433 = vpack.c.bf16 %v361, %v361
        %v434 = vpack.c.bf16 %v364, %v364
        %v435 = vpack.c.bf16 %v366, %v366
        %v436 = vpack.c.bf16 %v369, %v369
        %v437 = vpack.c.bf16 %v371, %v371
        %v438 = vpack.c.bf16 %v374, %v374
        %v439 = vpack.c.bf16 %v376, %v376
        %v440 = vpack.c.bf16 %v379, %v379
        %v441 = vpack.c.bf16 %v381, %v381
        %v442 = vpack.c.bf16 %v384, %v384
        %v443 = vpack.c.bf16 %v386, %v386
        %v444 = vpack.c.bf16 %v389, %v389
        %v445 = vpack.c.bf16 %v391, %v391
        %v446 = vpack.c.bf16 %v394, %v394
        %v447 = vpack.c.bf16 %v396, %v396
        %v448 = vpack.c.bf16 %v399, %v399
        %v449 = vpack.c.bf16 %v401, %v401
        %v450 = vpack.c.bf16 %v404, %v404
        %v451 = vpack.c.bf16 %v406, %v406
        %v452 = vpack.c.bf16 %v409, %v409
        %v453 = vpack.c.bf16 %v411, %v411
        %v454 = vpack.c.bf16 %v414, %v414
        %v455 = vpack.c.bf16 %v416, %v416
        %v456 = vpack.c.bf16 %v419, %v419
        %v457 = vpack.c.bf16 %v421, %v421
        %v458 = vpack.c.bf16 %v424, %v424
        %v459 = vpack.c.bf16 %v426, %v426
        %460 = vst [vmem:[%s137] sm:$0xf] %v428
        %461 = vst [vmem:[%s137 + $0x4] sm:$0xf] %v429
        %462 = vst [vmem:[%s137 + $0x8] sm:$0xf] %v430
        %463 = vst [vmem:[%s137 + $0xc] sm:$0xf] %v431
        %464 = vst [vmem:[%s137 + $0x10] sm:$0xf] %v432
        %465 = vst [vmem:[%s137 + $0x14] sm:$0xf] %v433
        %466 = vst [vmem:[%s137 + $0x18] sm:$0xf] %v434
        %467 = vst [vmem:[%s137 + $0x1c] sm:$0xf] %v435
        %468 = vst [vmem:[%s137 + $0x20] sm:$0xf] %v436
        %469 = vst [vmem:[%s137 + $0x24] sm:$0xf] %v437
        %470 = vst [vmem:[%s137 + $0x28] sm:$0xf] %v438
        %471 = vst [vmem:[%s137 + $0x2c] sm:$0xf] %v439
        %472 = vst [vmem:[%s137 + $0x30] sm:$0xf] %v440
        %473 = vst [vmem:[%s137 + $0x34] sm:$0xf] %v441
        %474 = vst [vmem:[%s137 + $0x38] sm:$0xf] %v442
        %475 = vst [vmem:[%s137 + $0x3c] sm:$0xf] %v443
        %476 = vst [vmem:[%s137 + $0x40] sm:$0xf] %v444
        %477 = vst [vmem:[%s137 + $0x44] sm:$0xf] %v445
        %478 = vst [vmem:[%s137 + $0x48] sm:$0xf] %v446
        %479 = vst [vmem:[%s137 + $0x4c] sm:$0xf] %v447
        %480 = vst [vmem:[%s137 + $0x50] sm:$0xf] %v448
        %481 = vst [vmem:[%s137 + $0x54] sm:$0xf] %v449
        %482 = vst [vmem:[%s137 + $0x58] sm:$0xf] %v450
        %483 = vst [vmem:[%s137 + $0x5c] sm:$0xf] %v451
        %484 = vst [vmem:[%s137 + $0x60] sm:$0xf] %v452
        %485 = vst [vmem:[%s137 + $0x64] sm:$0xf] %v453
        %486 = vst [vmem:[%s137 + $0x68] sm:$0xf] %v454
        %487 = vst [vmem:[%s137 + $0x6c] sm:$0xf] %v455
        %488 = vst [vmem:[%s137 + $0x70] sm:$0xf] %v456
        %489 = vst [vmem:[%s137 + $0x74] sm:$0xf] %v457
        %490 = vst [vmem:[%s137 + $0x78] sm:$0xf] %v458
        %491 = vst [vmem:[%s137 + $0x7c] sm:$0xf] %v459
        %s492 = sand.u32 %s71, 1
        %s493 = scalar_lea.sflag [#allocation3], %s492
        %s494 = sand.u32 %s71, 1
        %s495 = smul.addr %s494, 128
        %s496 = scalar_lea.vmem [#allocation2], %s495
        // Predicated region
        $region29: #{tpu_custom_call.1} parent=27 // pred_check
          %p497 = pneg %p81
        $region30: #{tpu_custom_call.1} parent=27 // pred_check_branch
          %499 = sbr.rel (%p497) target = $region32
        $region31: #{tpu_custom_call.1} parent=27 // pred_region
          %s500 = smul.u32 32, %s16
          %502 = vsyncadd %s493, 0
          %s503 = smul.addr %s500, 4
          %s504 = scalar_lea.hbm %s2, %s503
          %s505 = sshll.u32 %s496, 4
          %s506 = int_to_ptr.vmem [resolvable:$true] %s505
          %s507 = sshll.u32 %s504, 4
          %s508 = int_to_ptr.hbm [resolvable:$true] %s507
          %513 = dma.vmem_to_hbm [thread:$0]  %s506, 2048, %s508, %s493, 64, 64, 4
        $region32: #{tpu_custom_call.1} parent=27 // pred_fallthru
          _
      $region28: #{tpu_custom_call.1} parent=5 // pred_fallthru
        _
      %p514 = scmp.le.s32.totalorder 2, %s11
      // Predicated region
      $region33: #{tpu_custom_call.1} parent=5 // pred_check
        %p515 = pneg %p514
      $region34: #{tpu_custom_call.1} parent=5 // pred_check_branch
        %517 = sbr.rel (%p515) target = $region36
      $region35: #{tpu_custom_call.1} parent=5 // pred_region
        %s518 = ssub.s32 %s11, 2
        // Predicated region
        $region37: #{tpu_custom_call.1} parent=35 // pred_check
          %p519 = pneg %p87
        $region38: #{tpu_custom_call.1} parent=35 // pred_check_branch
          %521 = sbr.rel (%p519) target = $region40
        $region39: #{tpu_custom_call.1} parent=35 // pred_region
          %s522 = sand.u32 %s72, 1
          %s523 = scalar_lea.sflag [#allocation3], %s522
          %s524 = sand.u32 %s72, 1
          %s525 = smul.addr %s524, 128
          %s526 = scalar_lea.vmem [#allocation2], %s525
          %528 = dma.done %s523, 2048
        $region40: #{tpu_custom_call.1} parent=35 // pred_fallthru
          _
      $region36: #{tpu_custom_call.1} parent=5 // pred_fallthru
        _
    $region6: #{tpu_custom_call.1} parent=1 // loop_footer
      %s15 = sadd.s32 1, %s11
    $region7: #{tpu_custom_call.1} parent=1 // loop_footer_branch
      %10 = sbr.rel target = $region3
    $region8: #{tpu_custom_call.1} parent=1 // loop_exit
      _
    %529 = vsyncpa [#allocation3], 1
    %s530 = scalar_lea.sflag [#allocation3], 1
    %531 = vsyncpa %s530, 1

</llo_original>
